<compile_context>
chip_gen: v6e
topology: v6e:2x2x1
jax: 0.10.0
libtpu: 0.0.40
codegen_flags: <defaults>
</compile_context>

<pallas_src>
import jax
import jax.numpy as jnp
from jax.experimental import pallas as pl
from jax.experimental.pallas import tpu as pltpu


def _identity_kernel(x_ref, o_ref):
    # Pure pass-through: copy the current (tile_m, cols) tile.
    o_ref[...] = x_ref[...]


def _lane_dense_shape(n, d):
    """Pick a 2-D (rows, cols) view of the N*D elements with a wide, lane-dense
    (multiple-of-128) last dim when the element count allows it; otherwise keep
    the original layout (boundary stores will be masked — perf only)."""
    total = n * d
    for cols in (32768, 16384, 8192, 4096, 2048, 1024, 512, 256, 128):
        if total % cols == 0:
            return total // cols, cols
    return n, d


def identity_forward(x, *, tile_bytes=4 << 20, vmem_limit_bytes=48 << 20):
    """Identity backbone forward: returns x unchanged (shape (N, input_dim)).

    Implemented as an aliased, lane-dense, VMEM-budget-tiled streaming copy.
    """
    orig_shape = x.shape
    n, d = x.shape

    # Lane-dense slab view (contiguous reshape: free in XLA).
    rows, cols = _lane_dense_shape(n, d)
    xv = x.reshape(rows, cols)

    itemsize = jnp.dtype(x.dtype).itemsize
    # Sublane packing quantum: 8 (f32/i32), 16 (bf16/f16), 32 (int8/fp8).
    sublane_quantum = max(8, 32 // itemsize)

    # Row tile sized from a VMEM byte budget (~tile_bytes per buffer; 4 pipelined
    # buffers total for in+out double-buffering), rounded to the sublane quantum.
    row_bytes = cols * itemsize
    if rows <= sublane_quantum:
        tile_m = rows  # tiny input: single full-extent block (layout-legal)
    else:
        tile_m = max(1, tile_bytes // row_bytes)
        tile_m = max(sublane_quantum, (tile_m // sublane_quantum) * sublane_quantum)
        tile_m = min(tile_m, rows)

    grid = (pl.cdiv(rows, tile_m),)

    out = pl.pallas_call(
        _identity_kernel,
        out_shape=jax.ShapeDtypeStruct((rows, cols), x.dtype),
        grid=grid,
        in_specs=[pl.BlockSpec((tile_m, cols), lambda i: (i, 0))],
        out_specs=pl.BlockSpec((tile_m, cols), lambda i: (i, 0)),
        # Alias output onto the input buffer: no second HBM allocation for the result.
        input_output_aliases={0: 0},
        compiler_params=pltpu.CompilerParams(
            dimension_semantics=("parallel",),
            vmem_limit_bytes=vmem_limit_bytes,
        ),
    )(xv)

    return out.reshape(orig_shape)


if __name__ == "__main__":
    key = jax.random.PRNGKey(0)

    # Identity backbone: output_dim == input_dim; forward is a no-op on (N, input_dim).
    batch, input_dim = 256, 128
    x = jax.random.normal(key, (batch, input_dim), jnp.float32)

    out = identity_forward(x)
    out = jax.block_until_ready(out)

    # Reference: Identity.forward(x) == x, bit-exact.
    assert out.shape == x.shape
    assert out.dtype == x.dtype
    assert jnp.array_equal(out, x)

    print("KERNEL_OK")
</pallas_src>

<mosaic_0001>
module attributes {stable_mosaic.version = 11 : i64} {
  func.func @_identity_kernel(%arg0: i32, %arg1: memref<1x32768xf32, #tpu.memory_space<vmem>>, %arg2: memref<1x32768xf32, #tpu.memory_space<vmem>>) attributes {dimension_semantics = [#tpu.dimension_semantics<parallel>], iteration_bounds = array<i64: 1>, scalar_prefetch = 0 : i64, scratch_operands = 0 : i64, tpu.core_type = #tpu.core_type<tc>, window_params = [{transform_indices = @transform_0, window_bounds = array<i64: 1, 32768>}, {transform_indices = @transform_1, window_bounds = array<i64: 1, 32768>}]} {
    %c0 = arith.constant 0 : index
    %c0_0 = arith.constant 0 : index
    %0 = vector.load %arg1[%c0, %c0_0] : memref<1x32768xf32, #tpu.memory_space<vmem>>, vector<1x32768xf32>
    %c0_1 = arith.constant 0 : index
    %c0_2 = arith.constant 0 : index
    %1 = vector.load %arg2[%c0_1, %c0_2] : memref<1x32768xf32, #tpu.memory_space<vmem>>, vector<1x32768xf32>
    tpu.vector_store %arg2[%c0_1, %c0_2], %0 {strides = array<i32>} : memref<1x32768xf32, #tpu.memory_space<vmem>>, vector<1x32768xf32>,
    return
  }
  func.func @transform_0(%arg0: i32) -> (i32, i32) {
    %c0_i32 = arith.constant 0 : i32
    %c0_i32_0 = arith.constant 0 : i32
    return %arg0, %c0_i32 : i32, i32
  }
  func.func @transform_1(%arg0: i32) -> (i32, i32) {
    %c0_i32 = arith.constant 0 : i32
    %c0_i32_0 = arith.constant 0 : i32
    return %arg0, %c0_i32 : i32, i32
  }
}

</mosaic_0001>

<llo_original>
// kernel: tpu_custom_call.1
$region0: #{tpu_custom_call.1}
  #allocation0 [shape = 'u32[]', space=smem, size = 0x4, offset = 0x4, fixed_abs, tag = 'smem constant byte address 0x4 - core index']
  #allocation1 [shape = 'u32[144,128]{1,0:T(1,128)}', space=vmem, size = 0x12000, scoped, tag = 'internal scratch']
  %s0 = inlined_call_operand.hbm [shape: f32[1,32768], index: 0, kind: input, shape index: {}, may-alias: {0,1}]
  %s1 = inlined_call_operand.hbm [shape: f32[1,32768], index: 1, kind: output, shape index: {}, may-alias: {0,1}]
  %s2 = sld [smem:[#allocation0]]
  $region18: #{tpu_custom_call.1} parent=0
    _
  %s4 = ssub.s32 1, %s2
  %s5 = scalar_select 0, %s4, %s2
  $region1: #{tpu_custom_call.1} parent=0
    #allocation2 [shape = 'u8[131072]{0}', space=vmem, size = 0x20000, scoped, tag = 'input window, operand 0, single buffered']
    #allocation3 [shape = 's32[1]{0}', space=sflag, size = 0x4, scoped, tag = 'scoped memory for tpu_custom_call.1']
    #allocation4 [shape = 's32[1]{0}', space=sflag, size = 0x4, scoped, tag = 'scoped memory for tpu_custom_call.1']
    #allocation5 [shape = 'u8[131072]{0}', space=vmem, size = 0x20000, scoped, tag = 'output window, operand 0, single buffered']
    %6 = vsyncpa [#allocation3], 0
    %7 = vsyncpa [#allocation4], 0
    // Predicated region
    $region2: #{tpu_custom_call.1} parent=1 // pred_check
      _
    $region3: #{tpu_custom_call.1} parent=1 // pred_check_branch
      %9 = sbr.rel (0) target = $region5
    $region4: #{tpu_custom_call.1} parent=1 // pred_region
      %s11 = ssub.s32 4096, 4096
      %12 = vsyncadd [#allocation3], %s11
      %s14 = sshll.u32 [#allocation2], 4
      %s15 = int_to_ptr.vmem [resolvable:$true] %s14
      %17 = dma.hbm_to_vmem [thread:$0]  %s0, 4096, %s15, [#allocation3]
    $region5: #{tpu_custom_call.1} parent=1 // pred_fallthru
      _
    // Predicated region
    $region6: #{tpu_custom_call.1} parent=1 // pred_check
      _
    $region7: #{tpu_custom_call.1} parent=1 // pred_check_branch
      %19 = sbr.rel (0) target = $region9
    $region8: #{tpu_custom_call.1} parent=1 // pred_region
      %20 = dma.done [#allocation3], 4096
    $region9: #{tpu_custom_call.1} parent=1 // pred_fallthru
      _
    %v21 = vld [vmem:[#allocation2] sm:$0xff]
    %v22 = vld [vmem:[#allocation2 + $0x8] sm:$0xff]
    %v23 = vld [vmem:[#allocation2 + $0x10] sm:$0xff]
    %v24 = vld [vmem:[#allocation2 + $0x18] sm:$0xff]
    %v25 = vld [vmem:[#allocation2 + $0x20] sm:$0xff]
    %v26 = vld [vmem:[#allocation2 + $0x28] sm:$0xff]
    %v27 = vld [vmem:[#allocation2 + $0x30] sm:$0xff]
    %v28 = vld [vmem:[#allocation2 + $0x38] sm:$0xff]
    %v29 = vld [vmem:[#allocation2 + $0x40] sm:$0xff]
    %v30 = vld [vmem:[#allocation2 + $0x48] sm:$0xff]
    %v31 = vld [vmem:[#allocation2 + $0x50] sm:$0xff]
    %v32 = vld [vmem:[#allocation2 + $0x58] sm:$0xff]
    %v33 = vld [vmem:[#allocation2 + $0x60] sm:$0xff]
    %v34 = vld [vmem:[#allocation2 + $0x68] sm:$0xff]
    %v35 = vld [vmem:[#allocation2 + $0x70] sm:$0xff]
    %v36 = vld [vmem:[#allocation2 + $0x78] sm:$0xff]
    %v37 = vld [vmem:[#allocation2 + $0x80] sm:$0xff]
    %v38 = vld [vmem:[#allocation2 + $0x88] sm:$0xff]
    %v39 = vld [vmem:[#allocation2 + $0x90] sm:$0xff]
    %v40 = vld [vmem:[#allocation2 + $0x98] sm:$0xff]
    %v41 = vld [vmem:[#allocation2 + $0xa0] sm:$0xff]
    %v42 = vld [vmem:[#allocation2 + $0xa8] sm:$0xff]
    %v43 = vld [vmem:[#allocation2 + $0xb0] sm:$0xff]
    %v44 = vld [vmem:[#allocation2 + $0xb8] sm:$0xff]
    %v45 = vld [vmem:[#allocation2 + $0xc0] sm:$0xff]
    %v46 = vld [vmem:[#allocation2 + $0xc8] sm:$0xff]
    %v47 = vld [vmem:[#allocation2 + $0xd0] sm:$0xff]
    %v48 = vld [vmem:[#allocation2 + $0xd8] sm:$0xff]
    %v49 = vld [vmem:[#allocation2 + $0xe0] sm:$0xff]
    %v50 = vld [vmem:[#allocation2 + $0xe8] sm:$0xff]
    %v51 = vld [vmem:[#allocation2 + $0xf0] sm:$0xff]
    %v52 = vld [vmem:[#allocation2 + $0xf8] sm:$0xff]
    %53 = vst [vmem:[#allocation5] sm:$0xff] %v21
    %54 = vst [vmem:[#allocation5 + $0x8] sm:$0xff] %v22
    %55 = vst [vmem:[#allocation5 + $0x10] sm:$0xff] %v23
    %56 = vst [vmem:[#allocation5 + $0x18] sm:$0xff] %v24
    %57 = vst [vmem:[#allocation5 + $0x20] sm:$0xff] %v25
    %58 = vst [vmem:[#allocation5 + $0x28] sm:$0xff] %v26
    %59 = vst [vmem:[#allocation5 + $0x30] sm:$0xff] %v27
    %60 = vst [vmem:[#allocation5 + $0x38] sm:$0xff] %v28
    %61 = vst [vmem:[#allocation5 + $0x40] sm:$0xff] %v29
    %62 = vst [vmem:[#allocation5 + $0x48] sm:$0xff] %v30
    %63 = vst [vmem:[#allocation5 + $0x50] sm:$0xff] %v31
    %64 = vst [vmem:[#allocation5 + $0x58] sm:$0xff] %v32
    %65 = vst [vmem:[#allocation5 + $0x60] sm:$0xff] %v33
    %66 = vst [vmem:[#allocation5 + $0x68] sm:$0xff] %v34
    %67 = vst [vmem:[#allocation5 + $0x70] sm:$0xff] %v35
    %68 = vst [vmem:[#allocation5 + $0x78] sm:$0xff] %v36
    %69 = vst [vmem:[#allocation5 + $0x80] sm:$0xff] %v37
    %70 = vst [vmem:[#allocation5 + $0x88] sm:$0xff] %v38
    %71 = vst [vmem:[#allocation5 + $0x90] sm:$0xff] %v39
    %72 = vst [vmem:[#allocation5 + $0x98] sm:$0xff] %v40
    %73 = vst [vmem:[#allocation5 + $0xa0] sm:$0xff] %v41
    %74 = vst [vmem:[#allocation5 + $0xa8] sm:$0xff] %v42
    %75 = vst [vmem:[#allocation5 + $0xb0] sm:$0xff] %v43
    %76 = vst [vmem:[#allocation5 + $0xb8] sm:$0xff] %v44
    %77 = vst [vmem:[#allocation5 + $0xc0] sm:$0xff] %v45
    %78 = vst [vmem:[#allocation5 + $0xc8] sm:$0xff] %v46
    %79 = vst [vmem:[#allocation5 + $0xd0] sm:$0xff] %v47
    %80 = vst [vmem:[#allocation5 + $0xd8] sm:$0xff] %v48
    %81 = vst [vmem:[#allocation5 + $0xe0] sm:$0xff] %v49
    %82 = vst [vmem:[#allocation5 + $0xe8] sm:$0xff] %v50
    %83 = vst [vmem:[#allocation5 + $0xf0] sm:$0xff] %v51
    %84 = vst [vmem:[#allocation5 + $0xf8] sm:$0xff] %v52
    // Predicated region
    $region10: #{tpu_custom_call.1} parent=1 // pred_check
      _
    $region11: #{tpu_custom_call.1} parent=1 // pred_check_branch
      %86 = sbr.rel (0) target = $region13
    $region12: #{tpu_custom_call.1} parent=1 // pred_region
      %s88 = ssub.s32 4096, 4096
      %89 = vsyncadd [#allocation4], %s88
      %s91 = sshll.u32 [#allocation5], 4
      %s92 = int_to_ptr.vmem [resolvable:$true] %s91
      %94 = dma.vmem_to_hbm [thread:$0]  %s92, 4096, %s1, [#allocation4]
    $region13: #{tpu_custom_call.1} parent=1 // pred_fallthru
      _
    // Predicated region
    $region14: #{tpu_custom_call.1} parent=1 // pred_check
      _
    $region15: #{tpu_custom_call.1} parent=1 // pred_check_branch
      %96 = sbr.rel (0) target = $region17
    $region16: #{tpu_custom_call.1} parent=1 // pred_region
      %97 = dma.done [#allocation4], 4096
    $region17: #{tpu_custom_call.1} parent=1 // pred_fallthru
      _
    %98 = vsyncpa [#allocation3], 1
    %99 = vsyncpa [#allocation4], 1

</llo_original>
